<compile_context>
chip_gen: v5e
topology: v5e:2x2
jax: 0.10.0
libtpu: 0.0.40
codegen_flags: <defaults>
</compile_context>

<pallas_src>
import functools

import jax
import jax.numpy as jnp
from jax.experimental import pallas as pl
from jax.experimental.pallas import tpu as pltpu


# ----------------------------- activations ---------------------------------

def _apply_act(h, name):
    if name == "relu":
        return jnp.maximum(h, 0.0)
    if name == "quad":
        return h * h
    # gelu (tanh approximation)
    c = 0.7978845608028654  # sqrt(2/pi)
    return 0.5 * h * (1.0 + jnp.tanh(c * (h + 0.044715 * h * h * h)))


_ACT_PAIRS = {
    "relu": ("relu", "relu"),
    "quad": ("quad", "quad"),
    "half": ("quad", "relu"),
    "gelu": ("gelu", "gelu"),
}


def _act_pair(act):
    return _ACT_PAIRS.get(act, ("gelu", "gelu"))


def _round_up(x, m):
    return (x + m - 1) // m * m


# ------------------------------ fused kernel -------------------------------

def _mf_kernel(x_ref, uw_ref, ub_ref, dw_ref, o_ref, *, mid, act1, act2):
    # x: (Bp, Dinp)  uw: (Dinp, DIMp)  ub: (1, DIMp)  dw: (DIMp, OUTp)
    h = jnp.dot(x_ref[...], uw_ref[...], preferred_element_type=jnp.float32)
    h = h + ub_ref[...]

    if act1 == act2:
        h = _apply_act(h, act1)
    else:
        # Per-half activation without lane slicing: select by column index.
        col = jax.lax.broadcasted_iota(jnp.int32, h.shape, 1)
        h = jnp.where(col < mid, _apply_act(h, act1), _apply_act(h, act2))

    o_ref[...] = jnp.dot(
        h, dw_ref[...], preferred_element_type=jnp.float32
    ).astype(o_ref.dtype)


def mf_forward(params, x, act="gelu"):
    """Fused Pallas forward.  params = (U_weight_T, U_bias, diag_weight_T)."""
    uw, ub, dw = params               # (Din, dim), (1, dim), (dim, out_dim)
    B, Din = x.shape
    dim = uw.shape[1]
    out_dim = dw.shape[1]
    mid = dim // 2
    act1, act2 = _act_pair(act)

    # Pad to native TPU tiles: 8 sublanes (f32) x 128 lanes.
    Bp = _round_up(max(B, 8), 8)
    Dinp = _round_up(Din, 128)
    DIMp = _round_up(dim, 128)
    OUTp = _round_up(out_dim, 128)

    x_p = jnp.zeros((Bp, Dinp), jnp.float32).at[:B, :Din].set(x)
    uw_p = jnp.zeros((Dinp, DIMp), jnp.float32).at[:Din, :dim].set(uw)
    ub_p = jnp.zeros((1, DIMp), jnp.float32).at[:, :dim].set(ub)
    dw_p = jnp.zeros((DIMp, OUTp), jnp.float32).at[:dim, :out_dim].set(dw)

    kernel = functools.partial(_mf_kernel, mid=mid, act1=act1, act2=act2)
    out_p = pl.pallas_call(
        kernel,
        out_shape=jax.ShapeDtypeStruct((Bp, OUTp), jnp.float32),
        in_specs=[pl.BlockSpec(memory_space=pltpu.MemorySpace.VMEM)] * 4,
        out_specs=pl.BlockSpec(memory_space=pltpu.MemorySpace.VMEM),
    )(x_p, uw_p, ub_p, dw_p)

    return out_p[:B, :out_dim]


# ------------------------------ reference ----------------------------------

def mf_reference(params, x, act="gelu"):
    uw, ub, dw = params
    act1, act2 = _act_pair(act)
    h = jnp.dot(x, uw, precision=jax.lax.Precision.HIGHEST) + ub
    mid = h.shape[1] // 2
    h1 = _apply_act(h[:, :mid], act1)
    h2 = _apply_act(h[:, mid:], act2)
    h = jnp.concatenate([h1, h2], axis=1)
    return jnp.dot(h, dw, precision=jax.lax.Precision.HIGHEST)


# ------------------------------ param init ---------------------------------

def init_mf_params(key, embedding_cat_dim, dim, out_dim=1):
    """nn.Linear-style init; weights stored pre-transposed for y = x @ W + b."""
    ku_w, ku_b, kd_w = jax.random.split(key, 3)
    bound_u = 1.0 / (embedding_cat_dim ** 0.5)
    uw = jax.random.uniform(ku_w, (embedding_cat_dim, dim), jnp.float32,
                            minval=-bound_u, maxval=bound_u)
    ub = jax.random.uniform(ku_b, (1, dim), jnp.float32,
                            minval=-bound_u, maxval=bound_u)
    bound_d = 1.0 / (dim ** 0.5)
    dw = jax.random.uniform(kd_w, (dim, out_dim), jnp.float32,
                            minval=-bound_d, maxval=bound_d)
    return uw, ub, dw


# --------------------------------- main -------------------------------------

if __name__ == "__main__":
    embedding_cat_dim, dim, out_dim, batch = 16, 32, 1, 2

    key = jax.random.PRNGKey(0)
    key, kx = jax.random.split(key)
    x = jax.random.normal(kx, (batch, embedding_cat_dim), jnp.float32)
    params = init_mf_params(key, embedding_cat_dim, dim, out_dim)

    fwd = jax.jit(mf_forward, static_argnames=("act",))

    # Default MF config (act='gelu') plus 'half' to exercise the per-half mask.
    for act in ("gelu", "half"):
        out = jax.block_until_ready(fwd(params, x, act=act))
        ref = mf_reference(params, x, act=act)
        assert out.shape == (batch, out_dim)
        assert jnp.allclose(out, ref, atol=1e-4, rtol=1e-4), (act, out, ref)

    print("KERNEL_OK")
</pallas_src>

<mosaic_0001>
module attributes {stable_mosaic.version = 11 : i64} {
  func.func @_mf_kernel(%arg0: memref<8x128xf32, #tpu.memory_space<vmem>>, %arg1: memref<128x128xf32, #tpu.memory_space<vmem>>, %arg2: memref<1x128xf32, #tpu.memory_space<vmem>>, %arg3: memref<128x128xf32, #tpu.memory_space<vmem>>, %arg4: memref<8x128xf32, #tpu.memory_space<vmem>>) attributes {dimension_semantics = [], scalar_prefetch = 0 : i64, scratch_operands = 0 : i64, tpu.core_type = #tpu.core_type<tc>} {
    %c0 = arith.constant 0 : index
    %c0_0 = arith.constant 0 : index
    %0 = vector.load %arg0[%c0, %c0_0] : memref<8x128xf32, #tpu.memory_space<vmem>>, vector<8x128xf32>
    %c0_1 = arith.constant 0 : index
    %c0_2 = arith.constant 0 : index
    %1 = vector.load %arg1[%c0_1, %c0_2] : memref<128x128xf32, #tpu.memory_space<vmem>>, vector<128x128xf32>
    %cst = arith.constant dense<0.000000e+00> : vector<8x128xf32>
    %2 = tpu.matmul %0, %1, %cst {dimension_numbers = #tpu.dot_dimension_numbers<[1], [0], [0], [1], [0, 0, 1, 1], [], []>} : vector<8x128xf32>, vector<128x128xf32>, vector<8x128xf32> -> vector<8x128xf32>
    %c0_3 = arith.constant 0 : index
    %c0_4 = arith.constant 0 : index
    %3 = vector.load %arg2[%c0_3, %c0_4] : memref<1x128xf32, #tpu.memory_space<vmem>>, vector<1x128xf32>
    %4 = vector.broadcast %3 : vector<1x128xf32> to vector<8x128xf32>
    %5 = arith.addf %2, %4 : vector<8x128xf32>
    %cst_5 = arith.constant 5.000000e-01 : f32
    %6 = vector.broadcast %cst_5 : f32 to vector<8x128xf32>
    %7 = arith.mulf %6, %5 : vector<8x128xf32>
    %cst_6 = arith.constant 4.471500e-02 : f32
    %8 = vector.broadcast %cst_6 : f32 to vector<8x128xf32>
    %9 = arith.mulf %8, %5 : vector<8x128xf32>
    %10 = arith.mulf %9, %5 : vector<8x128xf32>
    %11 = arith.mulf %10, %5 : vector<8x128xf32>
    %12 = arith.addf %5, %11 : vector<8x128xf32>
    %cst_7 = arith.constant 0.797884583 : f32
    %13 = vector.broadcast %cst_7 : f32 to vector<8x128xf32>
    %14 = arith.mulf %13, %12 : vector<8x128xf32>
    %15 = math.tanh %14 : vector<8x128xf32>
    %cst_8 = arith.constant 1.000000e+00 : f32
    %16 = vector.broadcast %cst_8 : f32 to vector<8x128xf32>
    %17 = arith.addf %16, %15 : vector<8x128xf32>
    %18 = arith.mulf %7, %17 : vector<8x128xf32>
    %c0_9 = arith.constant 0 : index
    %c0_10 = arith.constant 0 : index
    %19 = vector.load %arg3[%c0_9, %c0_10] : memref<128x128xf32, #tpu.memory_space<vmem>>, vector<128x128xf32>
    %cst_11 = arith.constant dense<0.000000e+00> : vector<8x128xf32>
    %20 = tpu.matmul %18, %19, %cst_11 {dimension_numbers = #tpu.dot_dimension_numbers<[1], [0], [0], [1], [0, 0, 1, 1], [], []>} : vector<8x128xf32>, vector<128x128xf32>, vector<8x128xf32> -> vector<8x128xf32>
    %c0_12 = arith.constant 0 : index
    %c0_13 = arith.constant 0 : index
    %21 = vector.load %arg4[%c0_12, %c0_13] : memref<8x128xf32, #tpu.memory_space<vmem>>, vector<8x128xf32>
    tpu.vector_store %arg4[%c0_12, %c0_13], %20 {strides = array<i32>} : memref<8x128xf32, #tpu.memory_space<vmem>>, vector<8x128xf32>,
    return
  }
}

</mosaic_0001>

<llo_original>
// kernel: mf_forward.1
$region0: #{mf_forward.1}
  #allocation0 [shape = 'u32[]', space=smem, size = 0x4, offset = 0x4, fixed_abs, tag = 'smem constant byte address 0x4 - core index']
  #allocation1 [shape = 'u32[72,128]{1,0:T(1,128)}', space=vmem, size = 0x9000, scoped, tag = 'internal scratch']
  %s0 = inlined_call_operand.vmem [shape: f32[8,128], index: 0, kind: input, shape index: {}]
  %s1 = inlined_call_operand.vmem [shape: f32[128,128], index: 1, kind: input, shape index: {}]
  %s2 = inlined_call_operand.vmem [shape: f32[1,128], index: 2, kind: input, shape index: {}]
  %s3 = inlined_call_operand.vmem [shape: f32[128,128], index: 3, kind: input, shape index: {}]
  %s4 = inlined_call_operand.vmem [shape: f32[8,128], index: 4, kind: output, shape index: {}]
  %s5 = sld [smem:[#allocation0]]
  $region26: #{mf_forward.1} parent=0
    _
  %s7 = ssub.s32 1, %s5
  %s8 = scalar_select 0, %s7, %s5
  // Predicated region
  $region2: #{mf_forward.1} parent=0 // pred_check
    _
  $region3: #{mf_forward.1} parent=0 // pred_check_branch
    %10 = sbr.rel (0) target = $region5
  $region4: #{mf_forward.1} parent=0 // pred_region
    _
  $region5: #{mf_forward.1} parent=0 // pred_fallthru
    _
  // Predicated region
  $region6: #{mf_forward.1} parent=0 // pred_check
    _
  $region7: #{mf_forward.1} parent=0 // pred_check_branch
    %12 = sbr.rel (0) target = $region9
  $region8: #{mf_forward.1} parent=0 // pred_region
    _
  $region9: #{mf_forward.1} parent=0 // pred_fallthru
    _
  // Predicated region
  $region10: #{mf_forward.1} parent=0 // pred_check
    _
  $region11: #{mf_forward.1} parent=0 // pred_check_branch
    %14 = sbr.rel (0) target = $region13
  $region12: #{mf_forward.1} parent=0 // pred_region
    _
  $region13: #{mf_forward.1} parent=0 // pred_fallthru
    _
  // Predicated region
  $region14: #{mf_forward.1} parent=0 // pred_check
    _
  $region15: #{mf_forward.1} parent=0 // pred_check_branch
    %16 = sbr.rel (0) target = $region17
  $region16: #{mf_forward.1} parent=0 // pred_region
    _
  $region17: #{mf_forward.1} parent=0 // pred_fallthru
    _
  %v17 = vld [vmem:[%s0] sm:$0xff]
  %v18 = vld [vmem:[%s1] sm:$0xff]
  %v19 = vld [vmem:[%s1 + $0x8] sm:$0xff]
  %v20 = vld [vmem:[%s1 + $0x10] sm:$0xff]
  %v21 = vld [vmem:[%s1 + $0x18] sm:$0xff]
  %v22 = vld [vmem:[%s1 + $0x20] sm:$0xff]
  %v23 = vld [vmem:[%s1 + $0x28] sm:$0xff]
  %v24 = vld [vmem:[%s1 + $0x30] sm:$0xff]
  %v25 = vld [vmem:[%s1 + $0x38] sm:$0xff]
  %v26 = vld [vmem:[%s1 + $0x40] sm:$0xff]
  %v27 = vld [vmem:[%s1 + $0x48] sm:$0xff]
  %v28 = vld [vmem:[%s1 + $0x50] sm:$0xff]
  %v29 = vld [vmem:[%s1 + $0x58] sm:$0xff]
  %v30 = vld [vmem:[%s1 + $0x60] sm:$0xff]
  %v31 = vld [vmem:[%s1 + $0x68] sm:$0xff]
  %v32 = vld [vmem:[%s1 + $0x70] sm:$0xff]
  %v33 = vld [vmem:[%s1 + $0x78] sm:$0xff]
  %v34 = vld [vmem:[%s2] sm:$0x1]
  %v36 = vperm.slane %v34, 0
  %38 = vmatpush.msra.mxu0 %v33
  %39 = vmatpush.msra.mxu0 %v32
  %40 = vmatpush.msra.mxu0 %v31
  %41 = vmatpush.msra.mxu0 %v30
  %42 = vmatpush.msra.mxu0 %v29
  %43 = vmatpush.msra.mxu0 %v28
  %44 = vmatpush.msra.mxu0 %v27
  %45 = vmatpush.msra.mxu0 %v26
  %46 = vmatpush.msra.mxu0 %v25
  %47 = vmatpush.msra.mxu0 %v24
  %48 = vmatpush.msra.mxu0 %v23
  %49 = vmatpush.msra.mxu0 %v22
  %50 = vmatpush.msra.mxu0 %v21
  %51 = vmatpush.msra.mxu0 %v20
  %52 = vmatpush.msra.mxu0 %v19
  %53 = vmatpush.msra.mxu0 %v18
  %54 = vmatmul.f32.gmra.mxu0 %v17
  %v55 = vpop.f32.mrf.mxu0
  %v56 = vadd.f32 %v36, %v55
  %57 = vdwg.mxu0
  %v58 = vmul.f32 %v56, 0.5
  %v59 = vmul.f32 %v56, 0.044715
  %v60 = vmul.f32 %v59, %v56
  %v61 = vmul.f32 %v60, %v56
  %v62 = vadd.f32 %v56, %v61
  %v63 = vmul.f32 %v62, 0.7978846
  %v64 = vtanh.pop %v63
  %v65 = vadd.f32 %v64, 1.0
  %v66 = vmul.f32 %v58, %v65
  %v67 = vld [vmem:[%s3] sm:$0xff]
  %v68 = vld [vmem:[%s3 + $0x8] sm:$0xff]
  %v69 = vld [vmem:[%s3 + $0x10] sm:$0xff]
  %v70 = vld [vmem:[%s3 + $0x18] sm:$0xff]
  %v71 = vld [vmem:[%s3 + $0x20] sm:$0xff]
  %v72 = vld [vmem:[%s3 + $0x28] sm:$0xff]
  %v73 = vld [vmem:[%s3 + $0x30] sm:$0xff]
  %v74 = vld [vmem:[%s3 + $0x38] sm:$0xff]
  %v75 = vld [vmem:[%s3 + $0x40] sm:$0xff]
  %v76 = vld [vmem:[%s3 + $0x48] sm:$0xff]
  %v77 = vld [vmem:[%s3 + $0x50] sm:$0xff]
  %v78 = vld [vmem:[%s3 + $0x58] sm:$0xff]
  %v79 = vld [vmem:[%s3 + $0x60] sm:$0xff]
  %v80 = vld [vmem:[%s3 + $0x68] sm:$0xff]
  %v81 = vld [vmem:[%s3 + $0x70] sm:$0xff]
  %v82 = vld [vmem:[%s3 + $0x78] sm:$0xff]
  %83 = vmatpush.msra.mxu0 %v82
  %84 = vmatpush.msra.mxu0 %v81
  %85 = vmatpush.msra.mxu0 %v80
  %86 = vmatpush.msra.mxu0 %v79
  %87 = vmatpush.msra.mxu0 %v78
  %88 = vmatpush.msra.mxu0 %v77
  %89 = vmatpush.msra.mxu0 %v76
  %90 = vmatpush.msra.mxu0 %v75
  %91 = vmatpush.msra.mxu0 %v74
  %92 = vmatpush.msra.mxu0 %v73
  %93 = vmatpush.msra.mxu0 %v72
  %94 = vmatpush.msra.mxu0 %v71
  %95 = vmatpush.msra.mxu0 %v70
  %96 = vmatpush.msra.mxu0 %v69
  %97 = vmatpush.msra.mxu0 %v68
  %98 = vmatpush.msra.mxu0 %v67
  %99 = vmatmul.f32.gmra.mxu0 %v66
  %v100 = vpop.f32.mrf.mxu0
  %v101 = vadd.f32 0.0, %v100
  %102 = vdwg.mxu0
  %103 = vst [vmem:[%s4] sm:$0xff] %v101
  // Predicated region
  $region18: #{mf_forward.1} parent=0 // pred_check
    _
  $region19: #{mf_forward.1} parent=0 // pred_check_branch
    %105 = sbr.rel (0) target = $region21
  $region20: #{mf_forward.1} parent=0 // pred_region
    _
  $region21: #{mf_forward.1} parent=0 // pred_fallthru
    _
  // Predicated region
  $region22: #{mf_forward.1} parent=0 // pred_check
    _
  $region23: #{mf_forward.1} parent=0 // pred_check_branch
    %107 = sbr.rel (0) target = $region25
  $region24: #{mf_forward.1} parent=0 // pred_region
    _
  $region25: #{mf_forward.1} parent=0 // pred_fallthru
    _

</llo_original>
